<compile_context>
chip_gen: v7x
topology: tpu7x:2x2x1
jax: 0.10.0
libtpu: 0.0.40
codegen_flags: <defaults>
</compile_context>

<pallas_src>
import numpy as np
import jax
import jax.numpy as jnp
from jax.experimental import pallas as pl
from jax.experimental.pallas import tpu as pltpu

_SQRT_HALF = 0.7071067811865476


def _gelu_exact(x):
    # torch.nn.functional.gelu(approximate='none'): 0.5*x*(1+erf(x/sqrt(2)))
    return 0.5 * x * (1.0 + jax.lax.erf(x * _SQRT_HALF))


# ------------------------- tiling / layout helpers ------------------------- #

def _vmem_capacity_bytes():
    """Generation-aware VMEM capacity (falls back to the v7x 64 MiB floor)."""
    try:
        cap = getattr(pltpu.get_tpu_info(), "vmem_capacity_bytes", None)
        if cap:
            return int(cap)
    except Exception:
        pass
    return 64 * 1024 * 1024


def _pick_rows_tile(n_rows, bytes_per_row, fold_align=1, budget=8 << 20):
    """Row tile: ~512-row sweet spot, aligned for folded groups, clamped by a
    VMEM budget, shrunk until the grid has >=8 steps (pipeline / megacore)."""
    align = 8 * max(1, int(fold_align))
    cap = max(align, budget // max(bytes_per_row, 1))
    tn = min(512, cap)
    tn = max(align, (tn // align) * align)
    if n_rows <= tn:
        return n_rows                      # single block == full arrays (legal)
    while tn > align and pl.cdiv(n_rows, tn) < 8:
        nxt = ((tn // 2) // align) * align
        if nxt < align:
            break
        tn = nxt
    return tn


def _placed_cont_params(vec, bias, n_cat, n_cont, hidden, shared_vec):
    """Place per-feature embedding vectors / biases on their output lanes.

    Returns
      vmat : (n_cont, W)  row j holds vec_j on lanes [(n_cat+j)*H, (n_cat+j+1)*H)
      brow : (1, W)       bias rows placed the same way (zeros on cat lanes)
    with W = (n_cat + n_cont) * hidden.  (Tiny, row-invariant -> DMA'd once.)
    """
    H = hidden
    if shared_vec:
        v = jnp.broadcast_to(vec.reshape(-1, H)[:1], (n_cont, H))
    else:
        v = vec.reshape(n_cont, H)
    eye = jnp.eye(n_cont, dtype=jnp.float32)
    blk = (eye[:, :, None] * v[:, None, :]).reshape(n_cont, n_cont * H)
    vmat = jnp.pad(blk, ((0, 0), (n_cat * H, 0)))
    brow = jnp.pad(bias.reshape(1, n_cont * H), ((0, 0), (n_cat * H, 0)))
    return vmat.astype(jnp.float32), brow.astype(jnp.float32)


def _placed_table(table, feat_idx, width, hidden):
    """Pre-activate (exact GELU) a (V, H) embedding table and pad it so its
    values sit on the output lanes of categorical feature `feat_idx` inside a
    (V, W) block.  gelu∘gather == gather∘gelu, and gelu(0)=0 keeps the padded
    continuous lanes at exactly zero."""
    lo = feat_idx * hidden
    act = _gelu_exact(table.astype(jnp.float32))
    return jnp.pad(act, ((0, 0), (lo, width - lo - hidden)))


# ------------------------------ Pallas kernel ------------------------------ #

def _make_groups_kernel(cfgs):
    """cfgs: per group dict(n_cat, n_cont).

    Ref order: per group [feats, vmat?, brow?, *placed_tables], then one
    lane-dense output ref per group.  Categorical lookup = one-hot MXU matmul
    against small pre-GELU'd lane-placed tables resident in VMEM; continuous
    features = a short block-diagonal FMA chain on the VPU; each output block
    is written with ONE full store.
    """
    def kernel(*refs):
        pos = 0
        parsed = []
        for cfg in cfgs:
            g = {"feats": refs[pos]}
            pos += 1
            if cfg["n_cont"] > 0:
                g["vmat"], g["brow"] = refs[pos], refs[pos + 1]
                pos += 2
            g["tables"] = refs[pos:pos + cfg["n_cat"]]
            pos += cfg["n_cat"]
            parsed.append(g)
        out_refs = refs[pos:]

        for cfg, g, out_ref in zip(cfgs, parsed, out_refs):
            n_cat, n_cont = cfg["n_cat"], cfg["n_cont"]
            tn, _ = out_ref.shape
            feats = g["feats"][...]
            total = None

            # Categorical lookup on the MXU: onehot(tn, V) @ table(V, W).
            # Tables are pre-GELU'd outside the kernel, so no transcendentals
            # here.  HIGHEST precision keeps the 1.0*value selection exact.
            # TODO(synk): out-of-range categorical codes yield a zero row here
            # (torch nn.Embedding would raise); only matters for invalid input.
            for i in range(n_cat):
                tbl = g["tables"][i][...]                          # (V_i, W)
                idx = feats[:, i:i + 1].astype(jnp.int32)          # (tn, 1)
                onehot = (jax.lax.broadcasted_iota(
                    jnp.int32, (tn, tbl.shape[0]), 1) == idx).astype(jnp.float32)
                part = jnp.dot(onehot, tbl,
                               precision=jax.lax.Precision.HIGHEST,
                               preferred_element_type=jnp.float32)
                total = part if total is None else total + part

            # Continuous features: bias row + per-feature scale of the
            # block-diagonal placed vectors (bit-exact vs the reference).
            if n_cont > 0:
                vmat = g["vmat"][...]                              # (n_cont, W)
                brow = g["brow"][...]                              # (1, W)
                cont = brow + feats[:, n_cat:n_cat + 1] * vmat[0:1, :]
                for j in range(1, n_cont):
                    c = n_cat + j
                    cont = cont + feats[:, c:c + 1] * vmat[j:j + 1, :]
                total = cont if total is None else total + cont

            out_ref[...] = total.astype(out_ref.dtype)             # one full store
    return kernel


def fused_groups_embed(n_rows, groups, hidden):
    """Fused, lane-dense TFT embedding over `n_rows` rows (one pallas_call).

    Each group: dict(feats=(n_rows, n_cat+n_cont) f32 (cat codes first),
                     n_cat=int, tables=[(V_i, H)]*n_cat,
                     vec=(n_cont, H) or (1, H), bias=(n_cont, H),
                     shared_vec=bool)
    Returns one (n_rows, (n_cat+n_cont)*hidden) float32 array per group with
    feature-major lane layout, i.e. a free reshape to (..., F, H).
    """
    H = hidden
    row_map = lambda i: (i, 0)
    const_map = lambda i: (0, 0)

    plans = []
    bytes_per_row = 0
    max_fold = 1
    for gp in groups:
        n_feat = int(gp["feats"].shape[1])
        n_cat = int(gp["n_cat"])
        n_cont = n_feat - n_cat
        w_base = n_feat * H
        # Lane-dense outputs: fold several rows of a narrow cont-only group
        # (e.g. the target trend, tg*H = 32 lanes) into one 128-lane kernel row
        # so stores are full unmasked vregs.  Pure row-major reshapes -> free.
        fold = 1
        if (n_cat == 0 and w_base < 128 and 128 % w_base == 0
                and n_rows % (128 // w_base) == 0):
            fold = 128 // w_base
        plans.append(dict(n_cat=n_cat, n_cont=n_cont, w_base=w_base, fold=fold))
        bytes_per_row += 4 * n_feat * (1 + H)
        max_fold = max(max_fold, fold)

    vmem_cap = _vmem_capacity_bytes()
    tn = _pick_rows_tile(n_rows, bytes_per_row, max_fold, budget=vmem_cap // 8)
    grid = (pl.cdiv(n_rows, tn),)

    cfgs, args, in_specs, out_specs, out_shapes = [], [], [], [], []
    const_elems = 0
    flops = 0
    for gp, pln in zip(groups, plans):
        n_cat, n_cont, fold = pln["n_cat"], pln["n_cont"], pln["fold"]
        w_base = pln["w_base"]
        W = w_base * fold
        g_rows = n_rows // fold
        g_tn = tn // fold
        n_cat_f, n_cont_f = n_cat * fold, n_cont * fold
        cfgs.append(dict(n_cat=n_cat_f, n_cont=n_cont_f))

        feats = gp["feats"].astype(jnp.float32).reshape(g_rows, fold * (n_cat + n_cont))
        args.append(feats)
        in_specs.append(pl.BlockSpec((g_tn, fold * (n_cat + n_cont)), row_map))

        if n_cont_f > 0:
            vec, bias = gp["vec"], gp["bias"]
            shared = bool(gp.get("shared_vec", False))
            if fold > 1 and not shared:
                vec = jnp.tile(jnp.reshape(vec, (n_cont, H)), (fold, 1))
            if fold > 1:
                bias = jnp.tile(jnp.reshape(bias, (n_cont, H)), (fold, 1))
            vmat, brow = _placed_cont_params(vec, bias, n_cat_f, n_cont_f, H, shared)
            args += [vmat, brow]
            in_specs += [pl.BlockSpec((n_cont_f, W), const_map),
                         pl.BlockSpec((1, W), const_map)]
            const_elems += vmat.size + brow.size
            flops += 3 * n_rows * w_base

        tables = list(gp.get("tables", []))[:n_cat]
        assert len(tables) == n_cat, "need one table per categorical feature"
        for i, t in enumerate(tables):
            tp = _placed_table(t, i, W, H)          # pre-GELU'd, lane-placed
            args.append(tp)
            in_specs.append(pl.BlockSpec((int(t.shape[0]), W), const_map))
            const_elems += tp.size
            flops += 2 * g_rows * int(t.shape[0]) * W

        out_specs.append(pl.BlockSpec((g_tn, W), row_map))
        out_shapes.append(jax.ShapeDtypeStruct((g_rows, W), jnp.float32))

    cost = pl.CostEstimate(
        flops=int(flops),
        transcendentals=0,                    # GELU is pre-applied to the tables
        bytes_accessed=int(n_rows * bytes_per_row + 4 * const_elems))

    outs = pl.pallas_call(
        _make_groups_kernel(cfgs),
        out_shape=out_shapes,
        grid=grid,
        in_specs=in_specs,
        out_specs=out_specs,
        compiler_params=pltpu.CompilerParams(
            dimension_semantics=("parallel",),
            vmem_limit_bytes=int(min(vmem_cap // 2, 64 * 1024 * 1024))),
        cost_estimate=cost,
    )(*args)
    outs = list(outs) if isinstance(outs, (list, tuple)) else [outs]
    # Undo the row-folding: free row-major reshapes of the same buffers.
    return tuple(o.reshape(n_rows, pln["w_base"]) for o, pln in zip(outs, plans))


# ------------------------------ forward pass ------------------------------- #

def _static_embed_jnp(stat_exog, tables, vec, bias, n_cat):
    """Tiny static-features path (B rows) in plain XLA — a dedicated kernel is
    pure dispatch overhead at small B (per perf review)."""
    cont = stat_exog[:, n_cat:]
    ct = cont[:, :, None] * vec[n_cat:][None] + bias[n_cat:][None]
    if n_cat > 0:
        idx = stat_exog[:, :n_cat].astype(jnp.int32)
        emb = jnp.stack([tables[i][idx[:, i]] for i in range(n_cat)], axis=1)
        return jnp.concatenate([_gelu_exact(emb), ct], axis=1)
    return ct


def tft_embedding_forward(params, target_inp, stat_exog, multi_exog,
                          n_static_cat, n_temporal_cat):
    H = params["stat_vec"].shape[1]
    B, S = stat_exog.shape
    _, T, Ft = multi_exog.shape
    _, _, tg = target_inp.shape
    ncs, nct = n_static_cat, n_temporal_cat
    fcs, fct = S - ncs, Ft - nct
    N = B * T

    # ---- static features embedding: (B, S, H) ----
    if B >= 256:
        stat_group = dict(
            feats=stat_exog, n_cat=ncs, tables=list(params["emb_stat"]),
            vec=params["stat_vec"][ncs:] if fcs > 0 else None,
            bias=params["stat_bias"][ncs:] if fcs > 0 else None,
            shared_vec=False)
        (s_flat,) = fused_groups_embed(B, [stat_group], H)
        s_inp = s_flat.reshape(B, S, H)
    else:
        s_inp = _static_embed_jnp(stat_exog, params["emb_stat"],
                                  params["stat_vec"], params["stat_bias"], ncs)

    # ---- temporal exogenous + target trend, fused into ONE call over B*T rows ----
    temporal_group = dict(
        feats=multi_exog.reshape(N, Ft), n_cat=nct, tables=list(params["emb_fut"]),
        # NOTE: the original module broadcasts the single row cont_emb[nct] over
        # every continuous temporal feature (quirk reproduced exactly).
        vec=params["multi_vec"][nct:nct + 1] if fct > 0 else None,
        bias=params["multi_bias"][nct:] if fct > 0 else None,
        shared_vec=True)
    target_group = dict(
        feats=target_inp.reshape(N, tg), n_cat=0, tables=[],
        vec=params["tgt_vec"], bias=params["tgt_bias"], shared_vec=False)
    k_flat, t_flat = fused_groups_embed(N, [temporal_group, target_group], H)
    k_inp = k_flat.reshape(B, T, Ft, H)
    tgt_out = t_flat.reshape(B, T, tg, H)
    return s_inp, k_inp, tgt_out


# ------------------------------ pure-JAX ref ------------------------------- #

def reference_forward(params, target_inp, stat_exog, multi_exog, nc, nt):
    cont = stat_exog[:, nc:]
    ct = cont[:, :, None] * params["stat_vec"][nc:][None] + params["stat_bias"][nc:][None]
    if nc > 0:
        idx = stat_exog[:, :nc].astype(jnp.int32)
        emb = jnp.stack([params["emb_stat"][i][idx[:, i]] for i in range(nc)], axis=1)
        s = jnp.concatenate([_gelu_exact(emb), ct], axis=1)
    else:
        s = ct

    B, T, Ft = multi_exog.shape
    cont_t = multi_exog[:, :, nt:]
    ct_t = cont_t[..., None] * params["multi_vec"][nt] + params["multi_bias"][nt:]
    if nt > 0:
        idx_t = multi_exog[:, :, :nt].astype(jnp.int32)
        emb_t = jnp.stack([params["emb_fut"][i][idx_t[:, :, i]] for i in range(nt)], axis=1)
        emb_t = jnp.transpose(_gelu_exact(emb_t), (0, 2, 1, 3))
        k = jnp.concatenate([emb_t, ct_t], axis=2)
    else:
        k = ct_t

    tgt = target_inp[..., None] * params["tgt_vec"] + params["tgt_bias"]
    return s, k, tgt


# ---------------------------------- main ----------------------------------- #

def _run_case(key, B, T, H, static_features_size, temporal_features_size,
              static_embedding_sizes, temporal_embedding_sizes, target_size):
    nc_s = len(static_embedding_sizes)
    nc_t = len(temporal_embedding_sizes)
    keys = iter(jax.random.split(key, 32))

    def xavier_normal(k_, shape):
        fan_out, fan_in = shape
        std = (2.0 / (fan_in + fan_out)) ** 0.5
        return (std * jax.random.normal(k_, shape)).astype(jnp.float32)

    params = {
        "stat_vec": xavier_normal(next(keys), (static_features_size, H)),
        "stat_bias": jnp.zeros((static_features_size, H), jnp.float32),
        "multi_vec": xavier_normal(next(keys), (temporal_features_size, H)),
        "multi_bias": jnp.zeros((temporal_features_size, H), jnp.float32),
        "tgt_vec": xavier_normal(next(keys), (target_size, H)),
        "tgt_bias": jnp.zeros((target_size, H), jnp.float32),
        "emb_stat": [jax.random.normal(next(keys), (v, H), jnp.float32)
                     for v in static_embedding_sizes],
        "emb_fut": [jax.random.normal(next(keys), (v, H), jnp.float32)
                    for v in temporal_embedding_sizes],
    }

    stat_cat = jnp.stack([jax.random.randint(next(keys), (B,), 0, v)
                          for v in static_embedding_sizes], axis=1).astype(jnp.float32)
    stat_cont = jax.random.normal(next(keys), (B, static_features_size - nc_s), jnp.float32)
    stat_exog = jnp.concatenate([stat_cat, stat_cont], axis=1)

    mult_cat = jnp.stack([jax.random.randint(next(keys), (B, T), 0, v)
                          for v in temporal_embedding_sizes], axis=2).astype(jnp.float32)
    mult_cont = jax.random.normal(next(keys), (B, T, temporal_features_size - nc_t),
                                  jnp.float32)
    multi_exog = jnp.concatenate([mult_cat, mult_cont], axis=2)

    target_inp = jax.random.normal(next(keys), (B, T, target_size), jnp.float32)

    s_inp, k_inp, tgt_out = tft_embedding_forward(
        params, target_inp, stat_exog, multi_exog, nc_s, nc_t)
    jax.block_until_ready((s_inp, k_inp, tgt_out))

    assert s_inp.shape == (B, static_features_size, H)
    assert k_inp.shape == (B, T, temporal_features_size, H)
    assert tgt_out.shape == (B, T, target_size, H)

    s_ref, k_ref, t_ref = reference_forward(
        params, target_inp, stat_exog, multi_exog, nc_s, nc_t)
    np.testing.assert_allclose(np.asarray(s_inp), np.asarray(s_ref), rtol=1e-5, atol=1e-5)
    np.testing.assert_allclose(np.asarray(k_inp), np.asarray(k_ref), rtol=1e-5, atol=1e-5)
    np.testing.assert_allclose(np.asarray(tgt_out), np.asarray(t_ref), rtol=1e-5, atol=1e-5)


if __name__ == "__main__":
    root = jax.random.PRNGKey(0)
    k_small, k_big = jax.random.split(root)

    # Small spec-sized case (B=2, T=8, H=32, 5 static / 4 temporal features).
    _run_case(k_small, B=2, T=8, H=32,
              static_features_size=5, temporal_features_size=4,
              static_embedding_sizes=[7, 5], temporal_embedding_sizes=[6],
              target_size=1)

    # Larger case to exercise the multi-step row grid / pipelining path.
    _run_case(k_big, B=4, T=2048, H=32,
              static_features_size=5, temporal_features_size=4,
              static_embedding_sizes=[7, 5], temporal_embedding_sizes=[6],
              target_size=1)

    print("KERNEL_OK")
</pallas_src>

<mosaic_0001>
module attributes {stable_mosaic.version = 11 : i64} {
  func.func @kernel(%arg0: i32, %arg1: memref<16x4xf32, #tpu.memory_space<vmem>>, %arg2: memref<3x128xf32, #tpu.memory_space<vmem>>, %arg3: memref<1x128xf32, #tpu.memory_space<vmem>>, %arg4: memref<6x128xf32, #tpu.memory_space<vmem>>, %arg5: memref<4x4xf32, #tpu.memory_space<vmem>>, %arg6: memref<4x128xf32, #tpu.memory_space<vmem>>, %arg7: memref<1x128xf32, #tpu.memory_space<vmem>>, %arg8: memref<16x128xf32, #tpu.memory_space<vmem>>, %arg9: memref<4x128xf32, #tpu.memory_space<vmem>>) attributes {dimension_semantics = [#tpu.dimension_semantics<parallel>], iteration_bounds = array<i64: 1>, scalar_prefetch = 0 : i64, scratch_operands = 0 : i64, tpu.core_type = #tpu.core_type<tc>, window_params = [{transform_indices = @transform_0, window_bounds = array<i64: 16, 4>}, {pipeline_mode = #tpu.pipeline_mode<synchronous>, transform_indices = @transform_1, window_bounds = array<i64: 3, 128>}, {pipeline_mode = #tpu.pipeline_mode<synchronous>, transform_indices = @transform_2, window_bounds = array<i64: 1, 128>}, {pipeline_mode = #tpu.pipeline_mode<synchronous>, transform_indices = @transform_3, window_bounds = array<i64: 6, 128>}, {transform_indices = @transform_4, window_bounds = array<i64: 4, 4>}, {pipeline_mode = #tpu.pipeline_mode<synchronous>, transform_indices = @transform_5, window_bounds = array<i64: 4, 128>}, {pipeline_mode = #tpu.pipeline_mode<synchronous>, transform_indices = @transform_6, window_bounds = array<i64: 1, 128>}, {transform_indices = @transform_7, window_bounds = array<i64: 16, 128>}, {transform_indices = @transform_8, window_bounds = array<i64: 4, 128>}]} {
    %c0 = arith.constant 0 : index
    %c0_0 = arith.constant 0 : index
    %0 = vector.load %arg1[%c0, %c0_0] : memref<16x4xf32, #tpu.memory_space<vmem>>, vector<16x4xf32>
    %c0_1 = arith.constant 0 : index
    %c0_2 = arith.constant 0 : index
    %1 = vector.load %arg4[%c0_1, %c0_2] : memref<6x128xf32, #tpu.memory_space<vmem>>, vector<6x128xf32>
    %2 = vector.extract_strided_slice %0 {offsets = [0, 0], sizes = [16, 1], strides = [1, 1]} : vector<16x4xf32> to vector<16x1xf32>
    %3 = arith.fptosi %2 : vector<16x1xf32> to vector<16x1xi32>
    %4 = tpu.iota {dimensions = array<i32: 1>} : vector<16x6xi32>
    %5 = vector.broadcast %3 : vector<16x1xi32> to vector<16x6xi32>
    %6 = arith.cmpi eq, %4, %5 : vector<16x6xi32>
    %7 = arith.extui %6 : vector<16x6xi1> to vector<16x6xi32>
    %8 = arith.sitofp %7 : vector<16x6xi32> to vector<16x6xf32>
    %cst = arith.constant dense<0.000000e+00> : vector<16x128xf32>
    %9 = tpu.matmul %8, %1, %cst {dimension_numbers = #tpu.dot_dimension_numbers<[1], [0], [0], [1], [0, 0, 1, 1], [], []>, precision = #tpu.contract_precision<fp32>} : vector<16x6xf32>, vector<6x128xf32>, vector<16x128xf32> -> vector<16x128xf32>
    %c0_3 = arith.constant 0 : index
    %c0_4 = arith.constant 0 : index
    %10 = vector.load %arg2[%c0_3, %c0_4] : memref<3x128xf32, #tpu.memory_space<vmem>>, vector<3x128xf32>
    %c0_5 = arith.constant 0 : index
    %c0_6 = arith.constant 0 : index
    %11 = vector.load %arg3[%c0_5, %c0_6] : memref<1x128xf32, #tpu.memory_space<vmem>>, vector<1x128xf32>
    %12 = vector.extract_strided_slice %0 {offsets = [0, 1], sizes = [16, 1], strides = [1, 1]} : vector<16x4xf32> to vector<16x1xf32>
    %13 = vector.extract_strided_slice %10 {offsets = [0, 0], sizes = [1, 128], strides = [1, 1]} : vector<3x128xf32> to vector<1x128xf32>
    %14 = vector.broadcast %12 : vector<16x1xf32> to vector<16x128xf32>
    %15 = vector.broadcast %13 : vector<1x128xf32> to vector<16x128xf32>
    %16 = arith.mulf %14, %15 : vector<16x128xf32>
    %17 = vector.broadcast %11 : vector<1x128xf32> to vector<16x128xf32>
    %18 = arith.addf %17, %16 : vector<16x128xf32>
    %19 = vector.extract_strided_slice %0 {offsets = [0, 2], sizes = [16, 1], strides = [1, 1]} : vector<16x4xf32> to vector<16x1xf32>
    %20 = vector.extract_strided_slice %10 {offsets = [1, 0], sizes = [1, 128], strides = [1, 1]} : vector<3x128xf32> to vector<1x128xf32>
    %21 = vector.broadcast %19 : vector<16x1xf32> to vector<16x128xf32>
    %22 = vector.broadcast %20 : vector<1x128xf32> to vector<16x128xf32>
    %23 = arith.mulf %21, %22 : vector<16x128xf32>
    %24 = arith.addf %18, %23 : vector<16x128xf32>
    %25 = vector.extract_strided_slice %0 {offsets = [0, 3], sizes = [16, 1], strides = [1, 1]} : vector<16x4xf32> to vector<16x1xf32>
    %26 = vector.extract_strided_slice %10 {offsets = [2, 0], sizes = [1, 128], strides = [1, 1]} : vector<3x128xf32> to vector<1x128xf32>
    %27 = vector.broadcast %25 : vector<16x1xf32> to vector<16x128xf32>
    %28 = vector.broadcast %26 : vector<1x128xf32> to vector<16x128xf32>
    %29 = arith.mulf %27, %28 : vector<16x128xf32>
    %30 = arith.addf %24, %29 : vector<16x128xf32>
    %31 = arith.addf %9, %30 : vector<16x128xf32>
    %c0_7 = arith.constant 0 : index
    %c0_8 = arith.constant 0 : index
    %32 = vector.load %arg8[%c0_7, %c0_8] : memref<16x128xf32, #tpu.memory_space<vmem>>, vector<16x128xf32>
    tpu.vector_store %arg8[%c0_7, %c0_8], %31 {strides = array<i32>} : memref<16x128xf32, #tpu.memory_space<vmem>>, vector<16x128xf32>,
    %c0_9 = arith.constant 0 : index
    %c0_10 = arith.constant 0 : index
    %33 = vector.load %arg5[%c0_9, %c0_10] : memref<4x4xf32, #tpu.memory_space<vmem>>, vector<4x4xf32>
    %c0_11 = arith.constant 0 : index
    %c0_12 = arith.constant 0 : index
    %34 = vector.load %arg6[%c0_11, %c0_12] : memref<4x128xf32, #tpu.memory_space<vmem>>, vector<4x128xf32>
    %c0_13 = arith.constant 0 : index
    %c0_14 = arith.constant 0 : index
    %35 = vector.load %arg7[%c0_13, %c0_14] : memref<1x128xf32, #tpu.memory_space<vmem>>, vector<1x128xf32>
    %36 = vector.extract_strided_slice %33 {offsets = [0, 0], sizes = [4, 1], strides = [1, 1]} : vector<4x4xf32> to vector<4x1xf32>
    %37 = vector.extract_strided_slice %34 {offsets = [0, 0], sizes = [1, 128], strides = [1, 1]} : vector<4x128xf32> to vector<1x128xf32>
    %38 = vector.broadcast %36 : vector<4x1xf32> to vector<4x128xf32>
    %39 = vector.broadcast %37 : vector<1x128xf32> to vector<4x128xf32>
    %40 = arith.mulf %38, %39 : vector<4x128xf32>
    %41 = vector.broadcast %35 : vector<1x128xf32> to vector<4x128xf32>
    %42 = arith.addf %41, %40 : vector<4x128xf32>
    %43 = vector.extract_strided_slice %33 {offsets = [0, 1], sizes = [4, 1], strides = [1, 1]} : vector<4x4xf32> to vector<4x1xf32>
    %44 = vector.extract_strided_slice %34 {offsets = [1, 0], sizes = [1, 128], strides = [1, 1]} : vector<4x128xf32> to vector<1x128xf32>
    %45 = vector.broadcast %43 : vector<4x1xf32> to vector<4x128xf32>
    %46 = vector.broadcast %44 : vector<1x128xf32> to vector<4x128xf32>
    %47 = arith.mulf %45, %46 : vector<4x128xf32>
    %48 = arith.addf %42, %47 : vector<4x128xf32>
    %49 = vector.extract_strided_slice %33 {offsets = [0, 2], sizes = [4, 1], strides = [1, 1]} : vector<4x4xf32> to vector<4x1xf32>
    %50 = vector.extract_strided_slice %34 {offsets = [2, 0], sizes = [1, 128], strides = [1, 1]} : vector<4x128xf32> to vector<1x128xf32>
    %51 = vector.broadcast %49 : vector<4x1xf32> to vector<4x128xf32>
    %52 = vector.broadcast %50 : vector<1x128xf32> to vector<4x128xf32>
    %53 = arith.mulf %51, %52 : vector<4x128xf32>
    %54 = arith.addf %48, %53 : vector<4x128xf32>
    %55 = vector.extract_strided_slice %33 {offsets = [0, 3], sizes = [4, 1], strides = [1, 1]} : vector<4x4xf32> to vector<4x1xf32>
    %56 = vector.extract_strided_slice %34 {offsets = [3, 0], sizes = [1, 128], strides = [1, 1]} : vector<4x128xf32> to vector<1x128xf32>
    %57 = vector.broadcast %55 : vector<4x1xf32> to vector<4x128xf32>
    %58 = vector.broadcast %56 : vector<1x128xf32> to vector<4x128xf32>
    %59 = arith.mulf %57, %58 : vector<4x128xf32>
    %60 = arith.addf %54, %59 : vector<4x128xf32>
    %c0_15 = arith.constant 0 : index
    %c0_16 = arith.constant 0 : index
    %61 = vector.load %arg9[%c0_15, %c0_16] : memref<4x128xf32, #tpu.memory_space<vmem>>, vector<4x128xf32>
    tpu.vector_store %arg9[%c0_15, %c0_16], %60 {strides = array<i32>} : memref<4x128xf32, #tpu.memory_space<vmem>>, vector<4x128xf32>,
    return
  }
  func.func @transform_0(%arg0: i32) -> (i32, i32) {
    %c0_i32 = arith.constant 0 : i32
    %c0_i32_0 = arith.constant 0 : i32
    return %arg0, %c0_i32 : i32, i32
  }
  func.func @transform_1(%arg0: i32) -> (i32, i32) {
    %c0_i32 = arith.constant 0 : i32
    %c0_i32_0 = arith.constant 0 : i32
    %c0_i32_1 = arith.constant 0 : i32
    return %c0_i32, %c0_i32_0 : i32, i32
  }
  func.func @transform_2(%arg0: i32) -> (i32, i32) {
    %c0_i32 = arith.constant 0 : i32
    %c0_i32_0 = arith.constant 0 : i32
    %c0_i32_1 = arith.constant 0 : i32
    return %c0_i32, %c0_i32_0 : i32, i32
  }
  func.func @transform_3(%arg0: i32) -> (i32, i32) {
    %c0_i32 = arith.constant 0 : i32
    %c0_i32_0 = arith.constant 0 : i32
    %c0_i32_1 = arith.constant 0 : i32
    return %c0_i32, %c0_i32_0 : i32, i32
  }
  func.func @transform_4(%arg0: i32) -> (i32, i32) {
    %c0_i32 = arith.constant 0 : i32
    %c0_i32_0 = arith.constant 0 : i32
    return %arg0, %c0_i32 : i32, i32
  }
  func.func @transform_5(%arg0: i32) -> (i32, i32) {
    %c0_i32 = arith.constant 0 : i32
    %c0_i32_0 = arith.constant 0 : i32
    %c0_i32_1 = arith.constant 0 : i32
    return %c0_i32, %c0_i32_0 : i32, i32
  }
  func.func @transform_6(%arg0: i32) -> (i32, i32) {
    %c0_i32 = arith.constant 0 : i32
    %c0_i32_0 = arith.constant 0 : i32
    %c0_i32_1 = arith.constant 0 : i32
    return %c0_i32, %c0_i32_0 : i32, i32
  }
  func.func @transform_7(%arg0: i32) -> (i32, i32) {
    %c0_i32 = arith.constant 0 : i32
    %c0_i32_0 = arith.constant 0 : i32
    return %arg0, %c0_i32 : i32, i32
  }
  func.func @transform_8(%arg0: i32) -> (i32, i32) {
    %c0_i32 = arith.constant 0 : i32
    %c0_i32_0 = arith.constant 0 : i32
    return %arg0, %c0_i32 : i32, i32
  }
}

</mosaic_0001>

<llo_original>
// kernel: tpu_custom_call.1
$region0: #{tpu_custom_call.1}
  #allocation0 [shape = 'u32[]', space=smem, size = 0x4, offset = 0x4, fixed_abs, tag = 'smem constant byte address 0x4 - core index']
  #allocation1 [shape = 'u32[144,128]{1,0:T(1,128)}', space=vmem, size = 0x12000, scoped, tag = 'internal scratch']
  %s0 = inlined_call_operand.vmem [shape: f32[16,4], index: 0, kind: input, shape index: {}]
  %s1 = inlined_call_operand.vmem [shape: f32[3,128], index: 1, kind: input, shape index: {}]
  %s2 = inlined_call_operand.vmem [shape: f32[1,128], index: 2, kind: input, shape index: {}]
  %s3 = inlined_call_operand.vmem [shape: f32[6,128], index: 3, kind: input, shape index: {}]
  %s4 = inlined_call_operand.vmem [shape: f32[4,4], index: 4, kind: input, shape index: {}]
  %s5 = inlined_call_operand.vmem [shape: f32[4,128], index: 5, kind: input, shape index: {}]
  %s6 = inlined_call_operand.vmem [shape: f32[1,128], index: 6, kind: input, shape index: {}]
  %s7 = inlined_call_operand.hbm [shape: f32[16,128], index: 7, kind: output, shape index: {0}]
  %s8 = inlined_call_operand.hbm [shape: f32[4,128], index: 8, kind: output, shape index: {1}]
  %9 = xla_tuple %s7, %s8
  %s10 = sld [smem:[#allocation0]]
  $region46: #{tpu_custom_call.1} parent=0
    _
  %s12 = ssub.s32 1, %s10
  %s13 = scalar_select 0, %s12, %s10
  $region1: #{tpu_custom_call.1} parent=0
    #allocation2 [shape = 'u8[8192]{0}', space=vmem, size = 0x2000, scoped, tag = 'output window, operand 0, single buffered']
    #allocation3 [shape = 's32[1]{0}', space=sflag, size = 0x4, scoped, tag = 'scoped memory for tpu_custom_call.1']
    #allocation4 [shape = 'u8[2048]{0}', space=vmem, size = 0x800, scoped, tag = 'output window, operand 1, single buffered']
    #allocation5 [shape = 's32[1]{0}', space=sflag, size = 0x4, scoped, tag = 'scoped memory for tpu_custom_call.1']
    %14 = vsyncpa [#allocation3], 0
    %15 = vsyncpa [#allocation5], 0
    // Predicated region
    $region2: #{tpu_custom_call.1} parent=1 // pred_check
      _
    $region3: #{tpu_custom_call.1} parent=1 // pred_check_branch
      %17 = sbr.rel (0) target = $region5
    $region4: #{tpu_custom_call.1} parent=1 // pred_region
      _
    $region5: #{tpu_custom_call.1} parent=1 // pred_fallthru
      _
    // Predicated region
    $region6: #{tpu_custom_call.1} parent=1 // pred_check
      _
    $region7: #{tpu_custom_call.1} parent=1 // pred_check_branch
      %19 = sbr.rel (0) target = $region9
    $region8: #{tpu_custom_call.1} parent=1 // pred_region
      _
    $region9: #{tpu_custom_call.1} parent=1 // pred_fallthru
      _
    // Predicated region
    $region10: #{tpu_custom_call.1} parent=1 // pred_check
      _
    $region11: #{tpu_custom_call.1} parent=1 // pred_check_branch
      %21 = sbr.rel (0) target = $region13
    $region12: #{tpu_custom_call.1} parent=1 // pred_region
      _
    $region13: #{tpu_custom_call.1} parent=1 // pred_fallthru
      _
    // Predicated region
    $region14: #{tpu_custom_call.1} parent=1 // pred_check
      _
    $region15: #{tpu_custom_call.1} parent=1 // pred_check_branch
      %23 = sbr.rel (0) target = $region17
    $region16: #{tpu_custom_call.1} parent=1 // pred_region
      _
    $region17: #{tpu_custom_call.1} parent=1 // pred_fallthru
      _
    // Predicated region
    $region18: #{tpu_custom_call.1} parent=1 // pred_check
      _
    $region19: #{tpu_custom_call.1} parent=1 // pred_check_branch
      %25 = sbr.rel (0) target = $region21
    $region20: #{tpu_custom_call.1} parent=1 // pred_region
      _
    $region21: #{tpu_custom_call.1} parent=1 // pred_fallthru
      _
    // Predicated region
    $region22: #{tpu_custom_call.1} parent=1 // pred_check
      _
    $region23: #{tpu_custom_call.1} parent=1 // pred_check_branch
      %27 = sbr.rel (0) target = $region25
    $region24: #{tpu_custom_call.1} parent=1 // pred_region
      _
    $region25: #{tpu_custom_call.1} parent=1 // pred_fallthru
      _
    // Predicated region
    $region26: #{tpu_custom_call.1} parent=1 // pred_check
      _
    $region27: #{tpu_custom_call.1} parent=1 // pred_check_branch
      %29 = sbr.rel (0) target = $region29
    $region28: #{tpu_custom_call.1} parent=1 // pred_region
      _
    $region29: #{tpu_custom_call.1} parent=1 // pred_fallthru
      _
    %v30 = vld [vmem:[%s0] sm:$0xff]
    %v31 = vld [vmem:[%s0 + $0x8] sm:$0xff]
    %v32 = vld [vmem:[%s3] sm:$0x3f]
    %v33 = vcvt.f32.s32.to.zero.pseudo %v30
    %v34 = vcvt.f32.s32.to.zero.pseudo %v31
    %v35 = vlaneseq
    %v36 = vand.u32 %v35, 127
    %37 = vset.pattern.permute.xlu0 0
    %38 = vperm.xlu0 %37, %v33
    %v39 = vpop.permute.xlu0 %38
    %40 = vset.pattern.permute.xlu0 0
    %41 = vperm.xlu0 %40, %v34
    %v42 = vpop.permute.xlu0 %41
    %vm43 = vcmp.eq.s32.totalorder %v36, %v39
    %vm44 = vcmp.eq.s32.totalorder %v36, %v42
    %v45 = vsel %vm43, 1, 0
    %v46 = vsel %vm44, 1, 0
    %v47 = vcvt.s32.f32 %v45
    %v48 = vcvt.s32.f32 %v46
    %v49 = vld [vmem:[%s1] sm:$0x7]
    %v50 = vld [vmem:[%s2] sm:$0x1]
    %52 = vset.pattern.permute.xlu0 1
    %53 = vperm.xlu0 %52, %v30
    %v54 = vpop.permute.xlu0 %53
    %57 = vset.pattern.permute.xlu0 1
    %58 = vperm.xlu0 %57, %v31
    %v59 = vpop.permute.xlu0 %58
    %v61 = vlaneseq
    %v62 = vshrl.u32 %v61, 7
    %v63 = vsub.s32 0, %v62
    %v64 = vrot.slane %v49, %v63
    %v65 = vmul.f32 %v54, %v64
    %v66 = vmul.f32 %v59, %v64
    %v68 = vlaneseq
    %v69 = vshrl.u32 %v68, 7
    %v70 = vsub.s32 0, %v69
    %v71 = vrot.slane %v50, %v70
    %v73 = vadd.f32 %v71, %v65
    %v74 = vadd.f32 %v71, %v66
    %75 = vset.pattern.permute.xlu0 2
    %76 = vperm.xlu0 %75, %v30
    %v77 = vpop.permute.xlu0 %76
    %79 = vset.pattern.permute.xlu0 2
    %80 = vperm.xlu0 %79, %v31
    %v81 = vpop.permute.xlu0 %80
    %v83 = vlaneseq
    %v84 = vshrl.u32 %v83, 7
    %v85 = vsub.s32 1, %v84
    %v86 = vrot.slane %v49, %v85
    %v87 = vmul.f32 %v77, %v86
    %v88 = vmul.f32 %v81, %v86
    %v89 = vadd.f32 %v73, %v87
    %v90 = vadd.f32 %v74, %v88
    %91 = vset.pattern.permute.xlu0 3
    %92 = vperm.xlu0 %91, %v30
    %v93 = vpop.permute.xlu0 %92
    %95 = vset.pattern.permute.xlu0 3
    %96 = vperm.xlu0 %95, %v31
    %v97 = vpop.permute.xlu0 %96
    %v99 = vlaneseq
    %v100 = vshrl.u32 %v99, 7
    %v101 = vsub.s32 2, %v100
    %v102 = vrot.slane %v49, %v101
    %v103 = vmul.f32 %v93, %v102
    %v104 = vmul.f32 %v97, %v102
    %v105 = vadd.f32 %v89, %v103
    %v106 = vadd.f32 %v90, %v104
    %vm107 = vcmask 48128
    %v109 = vsel %vm107, %v47, 0
    %v112 = vsel %vm107, %v48, 0
    %vm114 = vcmask 1045504
    %v116 = vsel %vm114, %v32, 0
    %118 = vmatprep.subr.mxu0 0.0
    %v119 = vand.u32 %v116, 4294901760
    %120 = vmatpush1.msra.mxu0 %v119
    %121 = vmatprep.subr.mxu0 0.0
    %122 = vmatpush1.msra.mxu0 0.0
    %123 = vmatprep.subr.mxu0 0.0
    %124 = vmatpush1.msra.mxu0 0.0
    %125 = vmatprep.subr.mxu0 0.0
    %126 = vmatpush1.msra.mxu0 0.0
    %127 = vmatprep.subr.mxu0 0.0
    %128 = vmatpush1.msra.mxu0 0.0
    %129 = vmatprep.subr.mxu0 0.0
    %130 = vmatpush1.msra.mxu0 0.0
    %131 = vmatprep.subr.mxu0 0.0
    %132 = vmatpush1.msra.mxu0 0.0
    %133 = vmatprep.subr.mxu0 0.0
    %134 = vmatpush1.msra.mxu0 0.0
    %135 = vmatprep.subr.mxu0 0.0
    %136 = vmatpush1.msra.mxu0 0.0
    %137 = vmatprep.subr.mxu0 0.0
    %138 = vmatpush1.msra.mxu0 0.0
    %139 = vmatprep.subr.mxu0 0.0
    %140 = vmatpush1.msra.mxu0 0.0
    %141 = vmatprep.subr.mxu0 0.0
    %142 = vmatpush1.msra.mxu0 0.0
    %143 = vmatprep.subr.mxu0 0.0
    %144 = vmatpush1.msra.mxu0 0.0
    %145 = vmatprep.subr.mxu0 0.0
    %146 = vmatpush1.msra.mxu0 0.0
    %147 = vmatprep.subr.mxu0 0.0
    %148 = vmatpush1.msra.mxu0 0.0
    %149 = vmatprep.subr.mxu0 0.0
    %150 = vmatpush1.msra.mxu0 0.0
    %151 = vmatprep.subr.mxu0 0.0
    %152 = vmatpush1.msra.mxu0 0.0
    %153 = vmatprep.subr.mxu0 0.0
    %154 = vmatpush1.msra.mxu0 0.0
    %155 = vmatprep.subr.mxu0 0.0
    %156 = vmatpush1.msra.mxu0 0.0
    %157 = vmatprep.subr.mxu0 0.0
    %158 = vmatpush1.msra.mxu0 0.0
    %159 = vmatprep.subr.mxu0 0.0
    %160 = vmatpush1.msra.mxu0 0.0
    %161 = vmatprep.subr.mxu0 0.0
    %162 = vmatpush1.msra.mxu0 0.0
    %163 = vmatprep.subr.mxu0 0.0
    %164 = vmatpush1.msra.mxu0 0.0
    %165 = vmatprep.subr.mxu0 0.0
    %166 = vmatpush1.msra.mxu0 0.0
    %167 = vmatprep.subr.mxu0 0.0
    %168 = vmatpush1.msra.mxu0 0.0
    %169 = vmatprep.subr.mxu0 0.0
    %170 = vmatpush1.msra.mxu0 0.0
    %171 = vmatprep.subr.mxu0 0.0
    %172 = vmatpush1.msra.mxu0 0.0
    %173 = vmatprep.subr.mxu0 0.0
    %174 = vmatpush1.msra.mxu0 0.0
    %175 = vmatprep.subr.mxu0 0.0
    %176 = vmatpush1.msra.mxu0 0.0
    %177 = vmatprep.subr.mxu0 0.0
    %178 = vmatpush1.msra.mxu0 0.0
    %179 = vmatprep.subr.mxu0 0.0
    %180 = vmatpush1.msra.mxu0 0.0
    %181 = vmatprep.subr.mxu0 0.0
    %182 = vmatpush1.msra.mxu0 0.0
    %183 = vmatprep.mubr.f32.mxu0 0.0
    %v184 = vand.u32 %v109, 4294901760
    %v185 = vsub.f32 %v109, %v184
    %v186 = vand.u32 %v185, 4294901760
    %v187 = vsub.f32 %v185, %v186
    %v188 = vand.u32 %v187, 4294901760
    %189 = vmatmul.mubr.f32.gmra.mrb[0].mxu0 %v188
    %v190 = vpop.f32.mrb[0].mxu0
    %v191 = vadd.f32 %v105, %v190
    %v192 = vpop.f32.mrb[0].mxu0
    %193 = vmatprep.mubr.f32.mxu0 0.0
    %v194 = vand.u32 %v112, 4294901760
    %v195 = vsub.f32 %v112, %v194
    %v196 = vand.u32 %v195, 4294901760
    %v197 = vsub.f32 %v195, %v196
    %v198 = vand.u32 %v197, 4294901760
    %199 = vmatmul.mubr.f32.gmra.mrb[0].mxu0 %v198
    %v200 = vpop.f32.mrb[0].mxu0
    %v201 = vadd.f32 %v106, %v200
    %v202 = vpop.f32.mrb[0].mxu0
    %203 = vdwg.mxu0
    %204 = vmatprep.subr.mxu0 0.0
    %v205 = vand.u32 %v116, 4294901760
    %v206 = vsub.f32 %v116, %v205
    %v207 = vand.u32 %v206, 4294901760
    %v208 = vsub.f32 %v206, %v207
    %v209 = vand.u32 %v208, 4294901760
    %210 = vmatpush1.msra.mxu0 %v209
    %211 = vmatprep.subr.mxu0 0.0
    %212 = vmatpush1.msra.mxu0 0.0
    %213 = vmatprep.subr.mxu0 0.0
    %214 = vmatpush1.msra.mxu0 0.0
    %215 = vmatprep.subr.mxu0 0.0
    %216 = vmatpush1.msra.mxu0 0.0
    %217 = vmatprep.subr.mxu0 0.0
    %218 = vmatpush1.msra.mxu0 0.0
    %219 = vmatprep.subr.mxu0 0.0
    %220 = vmatpush1.msra.mxu0 0.0
    %221 = vmatprep.subr.mxu0 0.0
    %222 = vmatpush1.msra.mxu0 0.0
    %223 = vmatprep.subr.mxu0 0.0
    %224 = vmatpush1.msra.mxu0 0.0
    %225 = vmatprep.subr.mxu0 0.0
    %226 = vmatpush1.msra.mxu0 0.0
    %227 = vmatprep.subr.mxu0 0.0
    %228 = vmatpush1.msra.mxu0 0.0
    %229 = vmatprep.subr.mxu0 0.0
    %230 = vmatpush1.msra.mxu0 0.0
    %231 = vmatprep.subr.mxu0 0.0
    %232 = vmatpush1.msra.mxu0 0.0
    %233 = vmatprep.subr.mxu0 0.0
    %234 = vmatpush1.msra.mxu0 0.0
    %235 = vmatprep.subr.mxu0 0.0
    %236 = vmatpush1.msra.mxu0 0.0
    %237 = vmatprep.subr.mxu0 0.0
    %238 = vmatpush1.msra.mxu0 0.0
    %239 = vmatprep.subr.mxu0 0.0
    %240 = vmatpush1.msra.mxu0 0.0
    %241 = vmatprep.subr.mxu0 0.0
    %242 = vmatpush1.msra.mxu0 0.0
    %243 = vmatprep.subr.mxu0 0.0
    %244 = vmatpush1.msra.mxu0 0.0
    %245 = vmatprep.subr.mxu0 0.0
    %246 = vmatpush1.msra.mxu0 0.0
    %247 = vmatprep.subr.mxu0 0.0
    %248 = vmatpush1.msra.mxu0 0.0
    %249 = vmatprep.subr.mxu0 0.0
    %250 = vmatpush1.msra.mxu0 0.0
    %251 = vmatprep.subr.mxu0 0.0
    %252 = vmatpush1.msra.mxu0 0.0
    %253 = vmatprep.subr.mxu0 0.0
    %254 = vmatpush1.msra.mxu0 0.0
    %255 = vmatprep.subr.mxu0 0.0
    %256 = vmatpush1.msra.mxu0 0.0
    %257 = vmatprep.subr.mxu0 0.0
    %258 = vmatpush1.msra.mxu0 0.0
    %259 = vmatprep.subr.mxu0 0.0
    %260 = vmatpush1.msra.mxu0 0.0
    %261 = vmatprep.subr.mxu0 0.0
    %262 = vmatpush1.msra.mxu0 0.0
    %263 = vmatprep.subr.mxu0 0.0
    %264 = vmatpush1.msra.mxu0 0.0
    %265 = vmatprep.subr.mxu0 0.0
    %266 = vmatpush1.msra.mxu0 0.0
    %267 = vmatprep.subr.mxu0 0.0
    %268 = vmatpush1.msra.mxu0 0.0
    %269 = vmatprep.subr.mxu0 0.0
    %270 = vmatpush1.msra.mxu0 0.0
    %271 = vmatprep.subr.mxu0 0.0
    %272 = vmatpush1.msra.mxu0 0.0
    %273 = vmatprep.mubr.f32.mxu0 0.0
    %v274 = vand.u32 %v109, 4294901760
    %275 = vmatmul.mubr.f32.gmra.mrb[0].mxu0 %v274
    %v276 = vpop.f32.mrb[0].mxu0
    %v277 = vadd.f32 %v191, %v276
    %v278 = vpop.f32.mrb[0].mxu0
    %279 = vmatprep.mubr.f32.mxu0 0.0
    %v280 = vand.u32 %v112, 4294901760
    %281 = vmatmul.mubr.f32.gmra.mrb[0].mxu0 %v280
    %v282 = vpop.f32.mrb[0].mxu0
    %v283 = vadd.f32 %v201, %v282
    %v284 = vpop.f32.mrb[0].mxu0
    %285 = vdwg.mxu0
    %286 = vmatprep.subr.mxu0 0.0
    %v287 = vand.u32 %v116, 4294901760
    %v288 = vsub.f32 %v116, %v287
    %289 = vmatpush1.msra.mxu0 %v288
    %290 = vmatprep.subr.mxu0 0.0
    %291 = vmatpush1.msra.mxu0 0.0
    %292 = vmatprep.subr.mxu0 0.0
    %293 = vmatpush1.msra.mxu0 0.0
    %294 = vmatprep.subr.mxu0 0.0
    %295 = vmatpush1.msra.mxu0 0.0
    %296 = vmatprep.subr.mxu0 0.0
    %297 = vmatpush1.msra.mxu0 0.0
    %298 = vmatprep.subr.mxu0 0.0
    %299 = vmatpush1.msra.mxu0 0.0
    %300 = vmatprep.subr.mxu0 0.0
    %301 = vmatpush1.msra.mxu0 0.0
    %302 = vmatprep.subr.mxu0 0.0
    %303 = vmatpush1.msra.mxu0 0.0
    %304 = vmatprep.subr.mxu0 0.0
    %305 = vmatpush1.msra.mxu0 0.0
    %306 = vmatprep.subr.mxu0 0.0
    %307 = vmatpush1.msra.mxu0 0.0
    %308 = vmatprep.subr.mxu0 0.0
    %309 = vmatpush1.msra.mxu0 0.0
    %310 = vmatprep.subr.mxu0 0.0
    %311 = vmatpush1.msra.mxu0 0.0
    %312 = vmatprep.subr.mxu0 0.0
    %313 = vmatpush1.msra.mxu0 0.0
    %314 = vmatprep.subr.mxu0 0.0
    %315 = vmatpush1.msra.mxu0 0.0
    %316 = vmatprep.subr.mxu0 0.0
    %317 = vmatpush1.msra.mxu0 0.0
    %318 = vmatprep.subr.mxu0 0.0
    %319 = vmatpush1.msra.mxu0 0.0
    %320 = vmatprep.subr.mxu0 0.0
    %321 = vmatpush1.msra.mxu0 0.0
    %322 = vmatprep.subr.mxu0 0.0
    %323 = vmatpush1.msra.mxu0 0.0
    %324 = vmatprep.subr.mxu0 0.0
    %325 = vmatpush1.msra.mxu0 0.0
    %326 = vmatprep.subr.mxu0 0.0
    %327 = vmatpush1.msra.mxu0 0.0
    %328 = vmatprep.subr.mxu0 0.0
    %329 = vmatpush1.msra.mxu0 0.0
    %330 = vmatprep.subr.mxu0 0.0
    %331 = vmatpush1.msra.mxu0 0.0
    %332 = vmatprep.subr.mxu0 0.0
    %333 = vmatpush1.msra.mxu0 0.0
    %334 = vmatprep.subr.mxu0 0.0
    %335 = vmatpush1.msra.mxu0 0.0
    %336 = vmatprep.subr.mxu0 0.0
    %337 = vmatpush1.msra.mxu0 0.0
    %338 = vmatprep.subr.mxu0 0.0
    %339 = vmatpush1.msra.mxu0 0.0
    %340 = vmatprep.subr.mxu0 0.0
    %341 = vmatpush1.msra.mxu0 0.0
    %342 = vmatprep.subr.mxu0 0.0
    %343 = vmatpush1.msra.mxu0 0.0
    %344 = vmatprep.subr.mxu0 0.0
    %345 = vmatpush1.msra.mxu0 0.0
    %346 = vmatprep.subr.mxu0 0.0
    %347 = vmatpush1.msra.mxu0 0.0
    %348 = vmatprep.subr.mxu0 0.0
    %349 = vmatpush1.msra.mxu0 0.0
    %350 = vmatprep.subr.mxu0 0.0
    %351 = vmatpush1.msra.mxu0 0.0
    %352 = vmatprep.mubr.f32.mxu0 0.0
    %v353 = vand.u32 %v109, 4294901760
    %v354 = vsub.f32 %v109, %v353
    %355 = vmatmul.mubr.f32.gmra.mrb[0].mxu0 %v354
    %v356 = vpop.f32.mrb[0].mxu0
    %v357 = vadd.f32 %v277, %v356
    %v358 = vpop.f32.mrb[0].mxu0
    %359 = vmatprep.mubr.f32.mxu0 0.0
    %v360 = vand.u32 %v112, 4294901760
    %v361 = vsub.f32 %v112, %v360
    %362 = vmatmul.mubr.f32.gmra.mrb[0].mxu0 %v361
    %v363 = vpop.f32.mrb[0].mxu0
    %v364 = vadd.f32 %v283, %v363
    %v365 = vpop.f32.mrb[0].mxu0
    %366 = vdwg.mxu0
    %367 = vmatprep.subr.mxu0 0.0
    %v368 = vand.u32 %v116, 4294901760
    %369 = vmatpush1.msra.mxu0 %v368
    %370 = vmatprep.subr.mxu0 0.0
    %371 = vmatpush1.msra.mxu0 0.0
    %372 = vmatprep.subr.mxu0 0.0
    %373 = vmatpush1.msra.mxu0 0.0
    %374 = vmatprep.subr.mxu0 0.0
    %375 = vmatpush1.msra.mxu0 0.0
    %376 = vmatprep.subr.mxu0 0.0
    %377 = vmatpush1.msra.mxu0 0.0
    %378 = vmatprep.subr.mxu0 0.0
    %379 = vmatpush1.msra.mxu0 0.0
    %380 = vmatprep.subr.mxu0 0.0
    %381 = vmatpush1.msra.mxu0 0.0
    %382 = vmatprep.subr.mxu0 0.0
    %383 = vmatpush1.msra.mxu0 0.0
    %384 = vmatprep.subr.mxu0 0.0
    %385 = vmatpush1.msra.mxu0 0.0
    %386 = vmatprep.subr.mxu0 0.0
    %387 = vmatpush1.msra.mxu0 0.0
    %388 = vmatprep.subr.mxu0 0.0
    %389 = vmatpush1.msra.mxu0 0.0
    %390 = vmatprep.subr.mxu0 0.0
    %391 = vmatpush1.msra.mxu0 0.0
    %392 = vmatprep.subr.mxu0 0.0
    %393 = vmatpush1.msra.mxu0 0.0
    %394 = vmatprep.subr.mxu0 0.0
    %395 = vmatpush1.msra.mxu0 0.0
    %396 = vmatprep.subr.mxu0 0.0
    %397 = vmatpush1.msra.mxu0 0.0
    %398 = vmatprep.subr.mxu0 0.0
    %399 = vmatpush1.msra.mxu0 0.0
    %400 = vmatprep.subr.mxu0 0.0
    %401 = vmatpush1.msra.mxu0 0.0
    %402 = vmatprep.subr.mxu0 0.0
    %403 = vmatpush1.msra.mxu0 0.0
    %404 = vmatprep.subr.mxu0 0.0
    %405 = vmatpush1.msra.mxu0 0.0
    %406 = vmatprep.subr.mxu0 0.0
    %407 = vmatpush1.msra.mxu0 0.0
    %408 = vmatprep.subr.mxu0 0.0
    %409 = vmatpush1.msra.mxu0 0.0
    %410 = vmatprep.subr.mxu0 0.0
    %411 = vmatpush1.msra.mxu0 0.0
    %412 = vmatprep.subr.mxu0 0.0
    %413 = vmatpush1.msra.mxu0 0.0
    %414 = vmatprep.subr.mxu0 0.0
    %415 = vmatpush1.msra.mxu0 0.0
    %416 = vmatprep.subr.mxu0 0.0
    %417 = vmatpush1.msra.mxu0 0.0
    %418 = vmatprep.subr.mxu0 0.0
    %419 = vmatpush1.msra.mxu0 0.0
    %420 = vmatprep.subr.mxu0 0.0
    %421 = vmatpush1.msra.mxu0 0.0
    %422 = vmatprep.subr.mxu0 0.0
    %423 = vmatpush1.msra.mxu0 0.0
    %424 = vmatprep.subr.mxu0 0.0
    %425 = vmatpush1.msra.mxu0 0.0
    %426 = vmatprep.subr.mxu0 0.0
    %427 = vmatpush1.msra.mxu0 0.0
    %428 = vmatprep.subr.mxu0 0.0
    %429 = vmatpush1.msra.mxu0 0.0
    %430 = vmatprep.subr.mxu0 0.0
    %431 = vmatpush1.msra.mxu0 0.0
    %432 = vmatprep.mubr.f32.mxu0 0.0
    %v433 = vand.u32 %v109, 4294901760
    %v434 = vsub.f32 %v109, %v433
    %v435 = vand.u32 %v434, 4294901760
    %436 = vmatmul.mubr.f32.gmra.mrb[0].mxu0 %v435
    %v437 = vpop.f32.mrb[0].mxu0
    %v438 = vadd.f32 %v357, %v437
    %v439 = vpop.f32.mrb[0].mxu0
    %440 = vmatprep.mubr.f32.mxu0 0.0
    %v441 = vand.u32 %v112, 4294901760
    %v442 = vsub.f32 %v112, %v441
    %v443 = vand.u32 %v442, 4294901760
    %444 = vmatmul.mubr.f32.gmra.mrb[0].mxu0 %v443
    %v445 = vpop.f32.mrb[0].mxu0
    %v446 = vadd.f32 %v364, %v445
    %v447 = vpop.f32.mrb[0].mxu0
    %448 = vdwg.mxu0
    %449 = vmatprep.subr.mxu0 0.0
    %v450 = vand.u32 %v116, 4294901760
    %v451 = vsub.f32 %v116, %v450
    %v452 = vand.u32 %v451, 4294901760
    %453 = vmatpush1.msra.mxu0 %v452
    %454 = vmatprep.subr.mxu0 0.0
    %455 = vmatpush1.msra.mxu0 0.0
    %456 = vmatprep.subr.mxu0 0.0
    %457 = vmatpush1.msra.mxu0 0.0
    %458 = vmatprep.subr.mxu0 0.0
    %459 = vmatpush1.msra.mxu0 0.0
    %460 = vmatprep.subr.mxu0 0.0
    %461 = vmatpush1.msra.mxu0 0.0
    %462 = vmatprep.subr.mxu0 0.0
    %463 = vmatpush1.msra.mxu0 0.0
    %464 = vmatprep.subr.mxu0 0.0
    %465 = vmatpush1.msra.mxu0 0.0
    %466 = vmatprep.subr.mxu0 0.0
    %467 = vmatpush1.msra.mxu0 0.0
    %468 = vmatprep.subr.mxu0 0.0
    %469 = vmatpush1.msra.mxu0 0.0
    %470 = vmatprep.subr.mxu0 0.0
    %471 = vmatpush1.msra.mxu0 0.0
    %472 = vmatprep.subr.mxu0 0.0
    %473 = vmatpush1.msra.mxu0 0.0
    %474 = vmatprep.subr.mxu0 0.0
    %475 = vmatpush1.msra.mxu0 0.0
    %476 = vmatprep.subr.mxu0 0.0
    %477 = vmatpush1.msra.mxu0 0.0
    %478 = vmatprep.subr.mxu0 0.0
    %479 = vmatpush1.msra.mxu0 0.0
    %480 = vmatprep.subr.mxu0 0.0
    %481 = vmatpush1.msra.mxu0 0.0
    %482 = vmatprep.subr.mxu0 0.0
    %483 = vmatpush1.msra.mxu0 0.0
    %484 = vmatprep.subr.mxu0 0.0
    %485 = vmatpush1.msra.mxu0 0.0
    %486 = vmatprep.subr.mxu0 0.0
    %487 = vmatpush1.msra.mxu0 0.0
    %488 = vmatprep.subr.mxu0 0.0
    %489 = vmatpush1.msra.mxu0 0.0
    %490 = vmatprep.subr.mxu0 0.0
    %491 = vmatpush1.msra.mxu0 0.0
    %492 = vmatprep.subr.mxu0 0.0
    %493 = vmatpush1.msra.mxu0 0.0
    %494 = vmatprep.subr.mxu0 0.0
    %495 = vmatpush1.msra.mxu0 0.0
    %496 = vmatprep.subr.mxu0 0.0
    %497 = vmatpush1.msra.mxu0 0.0
    %498 = vmatprep.subr.mxu0 0.0
    %499 = vmatpush1.msra.mxu0 0.0
    %500 = vmatprep.subr.mxu0 0.0
    %501 = vmatpush1.msra.mxu0 0.0
    %502 = vmatprep.subr.mxu0 0.0
    %503 = vmatpush1.msra.mxu0 0.0
    %504 = vmatprep.subr.mxu0 0.0
    %505 = vmatpush1.msra.mxu0 0.0
    %506 = vmatprep.subr.mxu0 0.0
    %507 = vmatpush1.msra.mxu0 0.0
    %508 = vmatprep.subr.mxu0 0.0
    %509 = vmatpush1.msra.mxu0 0.0
    %510 = vmatprep.subr.mxu0 0.0
    %511 = vmatpush1.msra.mxu0 0.0
    %512 = vmatprep.subr.mxu0 0.0
    %513 = vmatpush1.msra.mxu0 0.0
    %514 = vmatprep.subr.mxu0 0.0
    %515 = vmatpush1.msra.mxu0 0.0
    %516 = vmatprep.mubr.f32.mxu0 0.0
    %v517 = vand.u32 %v109, 4294901760
    %518 = vmatmul.mubr.f32.gmra.mrb[0].mxu0 %v517
    %v519 = vpop.f32.mrb[0].mxu0
    %v520 = vadd.f32 %v438, %v519
    %v521 = vpop.f32.mrb[0].mxu0
    %522 = vmatprep.mubr.f32.mxu0 0.0
    %v523 = vand.u32 %v112, 4294901760
    %524 = vmatmul.mubr.f32.gmra.mrb[0].mxu0 %v523
    %v525 = vpop.f32.mrb[0].mxu0
    %v526 = vadd.f32 %v446, %v525
    %v527 = vpop.f32.mrb[0].mxu0
    %528 = vdwg.mxu0
    %529 = vmatprep.subr.mxu0 0.0
    %v530 = vand.u32 %v116, 4294901760
    %531 = vmatpush1.msra.mxu0 %v530
    %532 = vmatprep.subr.mxu0 0.0
    %533 = vmatpush1.msra.mxu0 0.0
    %534 = vmatprep.subr.mxu0 0.0
    %535 = vmatpush1.msra.mxu0 0.0
    %536 = vmatprep.subr.mxu0 0.0
    %537 = vmatpush1.msra.mxu0 0.0
    %538 = vmatprep.subr.mxu0 0.0
    %539 = vmatpush1.msra.mxu0 0.0
    %540 = vmatprep.subr.mxu0 0.0
    %541 = vmatpush1.msra.mxu0 0.0
    %542 = vmatprep.subr.mxu0 0.0
    %543 = vmatpush1.msra.mxu0 0.0
    %544 = vmatprep.subr.mxu0 0.0
    %545 = vmatpush1.msra.mxu0 0.0
    %546 = vmatprep.subr.mxu0 0.0
    %547 = vmatpush1.msra.mxu0 0.0
    %548 = vmatprep.subr.mxu0 0.0
    %549 = vmatpush1.msra.mxu0 0.0
    %550 = vmatprep.subr.mxu0 0.0
    %551 = vmatpush1.msra.mxu0 0.0
    %552 = vmatprep.subr.mxu0 0.0
    %553 = vmatpush1.msra.mxu0 0.0
    %554 = vmatprep.subr.mxu0 0.0
    %555 = vmatpush1.msra.mxu0 0.0
    %556 = vmatprep.subr.mxu0 0.0
    %557 = vmatpush1.msra.mxu0 0.0
    %558 = vmatprep.subr.mxu0 0.0
    %559 = vmatpush1.msra.mxu0 0.0
    %560 = vmatprep.subr.mxu0 0.0
    %561 = vmatpush1.msra.mxu0 0.0
    %562 = vmatprep.subr.mxu0 0.0
    %563 = vmatpush1.msra.mxu0 0.0
    %564 = vmatprep.subr.mxu0 0.0
    %565 = vmatpush1.msra.mxu0 0.0
    %566 = vmatprep.subr.mxu0 0.0
    %567 = vmatpush1.msra.mxu0 0.0
    %568 = vmatprep.subr.mxu0 0.0
    %569 = vmatpush1.msra.mxu0 0.0
    %570 = vmatprep.subr.mxu0 0.0
    %571 = vmatpush1.msra.mxu0 0.0
    %572 = vmatprep.subr.mxu0 0.0
    %573 = vmatpush1.msra.mxu0 0.0
    %574 = vmatprep.subr.mxu0 0.0
    %575 = vmatpush1.msra.mxu0 0.0
    %576 = vmatprep.subr.mxu0 0.0
    %577 = vmatpush1.msra.mxu0 0.0
    %578 = vmatprep.subr.mxu0 0.0
    %579 = vmatpush1.msra.mxu0 0.0
    %580 = vmatprep.subr.mxu0 0.0
    %581 = vmatpush1.msra.mxu0 0.0
    %582 = vmatprep.subr.mxu0 0.0
    %583 = vmatpush1.msra.mxu0 0.0
    %584 = vmatprep.subr.mxu0 0.0
    %585 = vmatpush1.msra.mxu0 0.0
    %586 = vmatprep.subr.mxu0 0.0
    %587 = vmatpush1.msra.mxu0 0.0
    %588 = vmatprep.subr.mxu0 0.0
    %589 = vmatpush1.msra.mxu0 0.0
    %590 = vmatprep.subr.mxu0 0.0
    %591 = vmatpush1.msra.mxu0 0.0
    %592 = vmatprep.subr.mxu0 0.0
    %593 = vmatpush1.msra.mxu0 0.0
    %594 = vmatprep.mubr.f32.mxu0 0.0
    %v595 = vand.u32 %v109, 4294901760
    %596 = vmatmul.mubr.f32.gmra.mrb[0].mxu0 %v595
    %v597 = vpop.f32.mrb[0].mxu0
    %v598 = vadd.f32 %v520, %v597
    %v599 = vpop.f32.mrb[0].mxu0
    %600 = vmatprep.mubr.f32.mxu0 0.0
    %v601 = vand.u32 %v112, 4294901760
    %602 = vmatmul.mubr.f32.gmra.mrb[0].mxu0 %v601
    %v603 = vpop.f32.mrb[0].mxu0
    %v604 = vadd.f32 %v526, %v603
    %v605 = vpop.f32.mrb[0].mxu0
    %606 = vdwg.mxu0
    %607 = vst [vmem:[#allocation2] sm:$0xff] %v598
    %608 = vst [vmem:[#allocation2 + $0x8] sm:$0xff] %v604
    %v609 = vld [vmem:[%s4] sm:$0xf]
    %v610 = vld [vmem:[%s5] sm:$0xf]
    %v611 = vld [vmem:[%s6] sm:$0x1]
    %613 = vset.pattern.permute.xlu0 0
    %614 = vperm.xlu0 %613, %v609
    %v615 = vpop.permute.xlu0 %614
    %v617 = vlaneseq
    %v618 = vshrl.u32 %v617, 7
    %v619 = vsub.s32 0, %v618
    %v620 = vrot.slane %v610, %v619
    %v621 = vmul.f32 %v615, %v620
    %v623 = vlaneseq
    %v624 = vshrl.u32 %v623, 7
    %v625 = vsub.s32 0, %v624
    %v626 = vrot.slane %v611, %v625
    %v628 = vadd.f32 %v626, %v621
    %629 = vset.pattern.permute.xlu0 1
    %630 = vperm.xlu0 %629, %v609
    %v631 = vpop.permute.xlu0 %630
    %v633 = vlaneseq
    %v634 = vshrl.u32 %v633, 7
    %v635 = vsub.s32 1, %v634
    %v636 = vrot.slane %v610, %v635
    %v637 = vmul.f32 %v631, %v636
    %v638 = vadd.f32 %v628, %v637
    %639 = vset.pattern.permute.xlu0 2
    %640 = vperm.xlu0 %639, %v609
    %v641 = vpop.permute.xlu0 %640
    %v643 = vlaneseq
    %v644 = vshrl.u32 %v643, 7
    %v645 = vsub.s32 2, %v644
    %v646 = vrot.slane %v610, %v645
    %v647 = vmul.f32 %v641, %v646
    %v648 = vadd.f32 %v638, %v647
    %649 = vset.pattern.permute.xlu0 3
    %650 = vperm.xlu0 %649, %v609
    %v651 = vpop.permute.xlu0 %650
    %v653 = vlaneseq
    %v654 = vshrl.u32 %v653, 7
    %v655 = vsub.s32 3, %v654
    %v656 = vrot.slane %v610, %v655
    %v657 = vmul.f32 %v651, %v656
    %v658 = vadd.f32 %v648, %v657
    %659 = vst [vmem:[#allocation4] sm:$0xf] %v658
    // Predicated region
    $region30: #{tpu_custom_call.1} parent=1 // pred_check
      _
    $region31: #{tpu_custom_call.1} parent=1 // pred_check_branch
      %661 = sbr.rel (0) target = $region33
    $region32: #{tpu_custom_call.1} parent=1 // pred_region
      %s663 = ssub.s32 256, 256
      %664 = vsyncadd [#allocation3], %s663
      %s665 = sshll.u32 [#allocation2], 4
      %s666 = int_to_ptr.vmem [resolvable:$true] %s665
      %671 = dma.vmem_to_hbm [thread:$0]  %s666, 256, %s7, [#allocation3], 128, 128, 8
    $region33: #{tpu_custom_call.1} parent=1 // pred_fallthru
      _
    // Predicated region
    $region34: #{tpu_custom_call.1} parent=1 // pred_check
      _
    $region35: #{tpu_custom_call.1} parent=1 // pred_check_branch
      %673 = sbr.rel (0) target = $region37
    $region36: #{tpu_custom_call.1} parent=1 // pred_region
      %s675 = ssub.s32 64, 64
      %676 = vsyncadd [#allocation5], %s675
      %s678 = sshll.u32 [#allocation4], 4
      %s679 = int_to_ptr.vmem [resolvable:$true] %s678
      %681 = dma.vmem_to_hbm [thread:$0]  %s679, 64, %s8, [#allocation5]
    $region37: #{tpu_custom_call.1} parent=1 // pred_fallthru
      _
    // Predicated region
    $region38: #{tpu_custom_call.1} parent=1 // pred_check
      _
    $region39: #{tpu_custom_call.1} parent=1 // pred_check_branch
      %683 = sbr.rel (0) target = $region41
    $region40: #{tpu_custom_call.1} parent=1 // pred_region
      %684 = dma.done [#allocation3], 256
    $region41: #{tpu_custom_call.1} parent=1 // pred_fallthru
      _
    // Predicated region
    $region42: #{tpu_custom_call.1} parent=1 // pred_check
      _
    $region43: #{tpu_custom_call.1} parent=1 // pred_check_branch
      %686 = sbr.rel (0) target = $region45
    $region44: #{tpu_custom_call.1} parent=1 // pred_region
      %687 = dma.done [#allocation5], 64
    $region45: #{tpu_custom_call.1} parent=1 // pred_fallthru
      _
    %688 = vsyncpa [#allocation3], 1
    %689 = vsyncpa [#allocation5], 1

</llo_original>
